<compile_context>
chip_gen: v5e
topology: v5e:2x2
jax: 0.10.0
libtpu: 0.0.40
codegen_flags: <defaults>
</compile_context>

<pallas_src>
import math

import jax
import jax.numpy as jnp
import numpy as np
from jax.experimental import pallas as pl
from jax.experimental.pallas import tpu as pltpu

MAX_POINT_LINE_DIST = 5.0   # self.max_point_line_dist
MAX_ANGLE_DEG = 10.0        # self.max_angle
_MAX_DIST2 = MAX_POINT_LINE_DIST * MAX_POINT_LINE_DIST
_COS2_MAX_ANGLE = math.cos(math.radians(MAX_ANGLE_DEG)) ** 2


def _proposal_target_kernel(gt_ref, prop_ref, labels_ref):
    # gt_ref    : (M, 4)  f32  gt line coords, cols = (x1, y1, x2, y2)
    # prop_ref  : (4, TN) f32  proposal geometry rows = (x1, y1, x2, y2)
    # labels_ref: (1, TN) i32  lane-dense labels
    px1 = prop_ref[0:1, :]          # (1, TN)
    py1 = prop_ref[1:2, :]
    px2 = prop_ref[2:3, :]
    py2 = prop_ref[3:4, :]

    gx1 = gt_ref[:, 0:1]            # (M, 1)
    gy1 = gt_ref[:, 1:2]
    gx2 = gt_ref[:, 2:3]
    gy2 = gt_ref[:, 3:4]

    # Per-gt quantities (tiny (M, 1) vectors, computed once per tile).
    gdx = gx2 - gx1
    gdy = gy2 - gy1
    glen2 = gdx * gdx + gdy * gdy                    # (M, 1)
    c0 = gdx * gy1 - gdy * gx1                       # hoisted gt-only affine term
    dist_thresh2 = _MAX_DIST2 * glen2                # (M, 1)
    cos2_glen2 = _COS2_MAX_ANGLE * glen2             # (M, 1) folded constant

    # Per-proposal quantities ((1, TN) rows).
    pdx = px2 - px1
    pdy = py2 - py1
    plen2 = pdx * pdx + pdy * pdy                    # (1, TN)

    # Perpendicular distance test in squared / multiplied form (no sqrt, no abs,
    # no divide):  |cross| / glen < 5   <=>   cross^2 < 25 * glen^2
    cross1 = gdx * py1 - gdy * px1 - c0              # (M, TN)
    cross2 = gdx * py2 - gdy * px2 - c0              # (M, TN)
    d1_ok = cross1 * cross1 < dist_thresh2
    d2_ok = cross2 * cross2 < dist_thresh2

    # Angle test (undirected, in [0, 90] deg):
    #   angle < 10deg  <=>  dot^2 > cos^2(10deg) * plen^2 * glen^2
    adot = pdx * gdx + pdy * gdy                     # (M, TN)
    a_ok = adot * adot > plen2 * cos2_glen2          # constant pre-folded into glen2

    match = jnp.logical_and(jnp.logical_and(d1_ok, d2_ok), a_ok)   # (M, TN) bool
    # "any over gt" as an int32 max reduce along the short sublane axis (XLU).
    labels_ref[...] = jnp.max(match.astype(jnp.int32), axis=0, keepdims=True)


def proposal_target_layer(proposals, gt_lines, *, max_tile=8192):
    """proposals: (N, 5) f32 rows = (batch_idx, x1, y1, x2, y2)
       gt_lines : (M, 4) f32 rows = (x1, y1, x2, y2)
       returns (proposals, labels[int32, (N,)])

       max_tile caps the per-step lane width; for N <= max_tile the whole
       problem runs as a single block (grid=(1,)).
    """
    n = proposals.shape[0]
    m = gt_lines.shape[0]

    # Pad N only to a multiple of 128 (lane width); choose the fewest grid
    # steps that keep the tile under max_tile lanes.  For multi-step grids use
    # an even step count so v7x's two TensorCores both get work.
    n128 = pl.cdiv(n, 128) * 128
    if n128 <= max_tile:
        num_blocks = 1
        tn = n128
    else:
        num_blocks = pl.cdiv(n128, max_tile)
        if num_blocks % 2:
            num_blocks += 1
        tn = pl.cdiv(pl.cdiv(n128, num_blocks), 128) * 128
    n_pad = num_blocks * tn

    # Lane-dense layout: N on the 128-lane axis.
    # TODO(synk): producing the geometry in (4, N) layout upstream would remove
    # this relayout entirely; allow_input_fusion below asks XLA to fuse it into
    # the pallas_call operand instead of a separate HBM pass.
    geom = proposals[:, 1:5].astype(jnp.float32).T            # (4, N)
    if n_pad != n:
        # Zero-length padded proposals fail the (strict) angle test -> label 0.
        geom = jnp.pad(geom, ((0, 0), (0, n_pad - n)))
    gt = gt_lines.astype(jnp.float32)                         # (M, 4)

    labels = pl.pallas_call(
        _proposal_target_kernel,
        out_shape=jax.ShapeDtypeStruct((1, n_pad), jnp.int32),
        grid=(num_blocks,),
        in_specs=[
            pl.BlockSpec((m, 4), lambda i: (0, 0)),            # full gt every step
            pl.BlockSpec((4, tn), lambda i: (0, i)),           # proposal tile
        ],
        out_specs=pl.BlockSpec((1, tn), lambda i: (0, i)),     # lane-dense labels
        compiler_params=pltpu.CompilerParams(
            dimension_semantics=("parallel",),
            vmem_limit_bytes=48 * 1024 * 1024,   # > v5e 16 MiB default, < v7x 64 MiB
            allow_input_fusion=[True, True],     # fuse gt astype + geom relayout
        ),
    )(gt, geom)
    return proposals, labels[0, :n]


def _reference(proposals, gt_lines):
    """Pure-numpy reference of the same semantics (float64)."""
    p = np.asarray(proposals, np.float64)[:, 1:5]
    g = np.asarray(gt_lines, np.float64)
    gdx = (g[:, 2] - g[:, 0])[None, :]
    gdy = (g[:, 3] - g[:, 1])[None, :]
    glen = np.sqrt(gdx ** 2 + gdy ** 2)

    def perp_dist(px, py):
        return np.abs(gdx * (py[:, None] - g[None, :, 1])
                      - gdy * (px[:, None] - g[None, :, 0])) / glen

    d1 = perp_dist(p[:, 0], p[:, 1])
    d2 = perp_dist(p[:, 2], p[:, 3])
    pdx = (p[:, 2] - p[:, 0])[:, None]
    pdy = (p[:, 3] - p[:, 1])[:, None]
    plen = np.sqrt(pdx ** 2 + pdy ** 2)
    cosang = np.abs(pdx * gdx + pdy * gdy) / (plen * glen)
    ang = np.degrees(np.arccos(np.clip(cosang, 0.0, 1.0)))
    mask = ((d1 < MAX_POINT_LINE_DIST) & (d2 < MAX_POINT_LINE_DIST)
            & (ang < MAX_ANGLE_DEG)).astype(np.float32).sum(axis=1)
    return (mask > 0).astype(np.int32)


if __name__ == "__main__":
    key = jax.random.PRNGKey(0)
    k1, k2, k3 = jax.random.split(key, 3)

    N, M = 200, 8   # N not a multiple of 128 to exercise padding
    # Proposals: (N, 5) = (batch_idx=0, x1, y1, x2, y2) in a 128x128 image.
    coords = jax.random.uniform(k1, (N, 4), jnp.float32, 0.0, 128.0)
    proposals = jnp.concatenate([jnp.zeros((N, 1), jnp.float32), coords], axis=1)

    # GT lines: half are small perturbations of proposals (to get positives),
    # half are random.
    pert = coords[:M // 2] + jax.random.uniform(k2, (M // 2, 4), jnp.float32,
                                                -1.0, 1.0)
    rand_gt = jax.random.uniform(k3, (M // 2, 4), jnp.float32, 0.0, 128.0)
    gt_lines = jnp.concatenate([pert, rand_gt], axis=0)

    ref_labels = _reference(np.asarray(proposals), np.asarray(gt_lines))

    # 1) Default path: single big block, grid=(1,)  (jitted so the wrapper
    #    relayout can fuse into the pallas_call).
    single_block = jax.jit(lambda p, g: proposal_target_layer(p, g))
    rois, labels = single_block(proposals, gt_lines)
    jax.block_until_ready(labels)
    np.testing.assert_array_equal(np.asarray(labels), ref_labels)
    assert rois.shape == proposals.shape and labels.dtype == jnp.int32
    assert labels.shape == (N,)

    # 2) Small max_tile to exercise the multi-step "parallel" grid path.
    multi_block = jax.jit(lambda p, g: proposal_target_layer(p, g, max_tile=128))
    rois2, labels2 = multi_block(proposals, gt_lines)
    jax.block_until_ready(labels2)
    np.testing.assert_array_equal(np.asarray(labels2), ref_labels)

    print("KERNEL_OK")
</pallas_src>

<mosaic_0001>
module attributes {stable_mosaic.version = 11 : i64} {
  func.func @_proposal_target_kernel(%arg0: i32, %arg1: memref<8x4xf32, #tpu.memory_space<vmem>>, %arg2: memref<4x256xf32, #tpu.memory_space<vmem>>, %arg3: memref<1x256xi32, #tpu.memory_space<vmem>>) attributes {dimension_semantics = [#tpu.dimension_semantics<parallel>], iteration_bounds = array<i64: 1>, scalar_prefetch = 0 : i64, scratch_operands = 0 : i64, tpu.core_type = #tpu.core_type<tc>, window_params = [{pipeline_mode = #tpu.pipeline_mode<synchronous>, transform_indices = @transform_0, window_bounds = array<i64: 8, 4>}, {transform_indices = @transform_1, window_bounds = array<i64: 4, 256>}, {transform_indices = @transform_2, window_bounds = array<i64: 1, 256>}]} {
    %c0 = arith.constant 0 : index
    %c0_0 = arith.constant 0 : index
    %0 = vector.load %arg2[%c0, %c0_0] : memref<4x256xf32, #tpu.memory_space<vmem>>, vector<1x256xf32>
    %c1 = arith.constant 1 : index
    %c0_1 = arith.constant 0 : index
    %1 = vector.load %arg2[%c1, %c0_1] : memref<4x256xf32, #tpu.memory_space<vmem>>, vector<1x256xf32>
    %c2 = arith.constant 2 : index
    %c0_2 = arith.constant 0 : index
    %2 = vector.load %arg2[%c2, %c0_2] : memref<4x256xf32, #tpu.memory_space<vmem>>, vector<1x256xf32>
    %c3 = arith.constant 3 : index
    %c0_3 = arith.constant 0 : index
    %3 = vector.load %arg2[%c3, %c0_3] : memref<4x256xf32, #tpu.memory_space<vmem>>, vector<1x256xf32>
    %c0_4 = arith.constant 0 : index
    %c0_5 = arith.constant 0 : index
    %4 = vector.load %arg1[%c0_4, %c0_5] : memref<8x4xf32, #tpu.memory_space<vmem>>, vector<8x1xf32>
    %c0_6 = arith.constant 0 : index
    %c1_7 = arith.constant 1 : index
    %5 = vector.load %arg1[%c0_6, %c1_7] : memref<8x4xf32, #tpu.memory_space<vmem>>, vector<8x1xf32>
    %c0_8 = arith.constant 0 : index
    %c2_9 = arith.constant 2 : index
    %6 = vector.load %arg1[%c0_8, %c2_9] : memref<8x4xf32, #tpu.memory_space<vmem>>, vector<8x1xf32>
    %c0_10 = arith.constant 0 : index
    %c3_11 = arith.constant 3 : index
    %7 = vector.load %arg1[%c0_10, %c3_11] : memref<8x4xf32, #tpu.memory_space<vmem>>, vector<8x1xf32>
    %8 = arith.subf %6, %4 : vector<8x1xf32>
    %9 = arith.subf %7, %5 : vector<8x1xf32>
    %10 = arith.mulf %8, %8 : vector<8x1xf32>
    %11 = arith.mulf %9, %9 : vector<8x1xf32>
    %12 = arith.addf %10, %11 : vector<8x1xf32>
    %13 = arith.mulf %8, %5 : vector<8x1xf32>
    %14 = arith.mulf %9, %4 : vector<8x1xf32>
    %15 = arith.subf %13, %14 : vector<8x1xf32>
    %cst = arith.constant 2.500000e+01 : f32
    %16 = vector.broadcast %cst : f32 to vector<8x1xf32>
    %17 = arith.mulf %16, %12 : vector<8x1xf32>
    %cst_12 = arith.constant 0.969846308 : f32
    %18 = vector.broadcast %cst_12 : f32 to vector<8x1xf32>
    %19 = arith.mulf %18, %12 : vector<8x1xf32>
    %20 = arith.subf %2, %0 : vector<1x256xf32>
    %21 = arith.subf %3, %1 : vector<1x256xf32>
    %22 = arith.mulf %20, %20 : vector<1x256xf32>
    %23 = arith.mulf %21, %21 : vector<1x256xf32>
    %24 = arith.addf %22, %23 : vector<1x256xf32>
    %25 = vector.broadcast %8 : vector<8x1xf32> to vector<8x256xf32>
    %26 = vector.broadcast %1 : vector<1x256xf32> to vector<8x256xf32>
    %27 = arith.mulf %25, %26 : vector<8x256xf32>
    %28 = vector.broadcast %9 : vector<8x1xf32> to vector<8x256xf32>
    %29 = vector.broadcast %0 : vector<1x256xf32> to vector<8x256xf32>
    %30 = arith.mulf %28, %29 : vector<8x256xf32>
    %31 = arith.subf %27, %30 : vector<8x256xf32>
    %32 = vector.broadcast %15 : vector<8x1xf32> to vector<8x256xf32>
    %33 = arith.subf %31, %32 : vector<8x256xf32>
    %34 = vector.broadcast %8 : vector<8x1xf32> to vector<8x256xf32>
    %35 = vector.broadcast %3 : vector<1x256xf32> to vector<8x256xf32>
    %36 = arith.mulf %34, %35 : vector<8x256xf32>
    %37 = vector.broadcast %9 : vector<8x1xf32> to vector<8x256xf32>
    %38 = vector.broadcast %2 : vector<1x256xf32> to vector<8x256xf32>
    %39 = arith.mulf %37, %38 : vector<8x256xf32>
    %40 = arith.subf %36, %39 : vector<8x256xf32>
    %41 = vector.broadcast %15 : vector<8x1xf32> to vector<8x256xf32>
    %42 = arith.subf %40, %41 : vector<8x256xf32>
    %43 = arith.mulf %33, %33 : vector<8x256xf32>
    %44 = vector.broadcast %17 : vector<8x1xf32> to vector<8x256xf32>
    %45 = arith.cmpf olt, %43, %44 : vector<8x256xf32>
    %46 = arith.mulf %42, %42 : vector<8x256xf32>
    %47 = vector.broadcast %17 : vector<8x1xf32> to vector<8x256xf32>
    %48 = arith.cmpf olt, %46, %47 : vector<8x256xf32>
    %49 = vector.broadcast %20 : vector<1x256xf32> to vector<8x256xf32>
    %50 = vector.broadcast %8 : vector<8x1xf32> to vector<8x256xf32>
    %51 = arith.mulf %49, %50 : vector<8x256xf32>
    %52 = vector.broadcast %21 : vector<1x256xf32> to vector<8x256xf32>
    %53 = vector.broadcast %9 : vector<8x1xf32> to vector<8x256xf32>
    %54 = arith.mulf %52, %53 : vector<8x256xf32>
    %55 = arith.addf %51, %54 : vector<8x256xf32>
    %56 = arith.mulf %55, %55 : vector<8x256xf32>
    %57 = vector.broadcast %24 : vector<1x256xf32> to vector<8x256xf32>
    %58 = vector.broadcast %19 : vector<8x1xf32> to vector<8x256xf32>
    %59 = arith.mulf %57, %58 : vector<8x256xf32>
    %60 = arith.cmpf ogt, %56, %59 : vector<8x256xf32>
    %61 = arith.andi %45, %48 : vector<8x256xi1>
    %62 = arith.andi %61, %60 : vector<8x256xi1>
    %63 = arith.extui %62 : vector<8x256xi1> to vector<8x256xi32>
    %cst_13 = arith.constant dense<-2147483648> : vector<256xi32>
    %64 = vector.multi_reduction <maxsi>, %63, %cst_13 [0] : vector<8x256xi32> to vector<256xi32>
    %65 = vector.shape_cast %64 : vector<256xi32> to vector<1x256xi32>
    %c0_14 = arith.constant 0 : index
    %c0_15 = arith.constant 0 : index
    %66 = vector.load %arg3[%c0_14, %c0_15] : memref<1x256xi32, #tpu.memory_space<vmem>>, vector<1x256xi32>
    tpu.vector_store %arg3[%c0_14, %c0_15], %65 {strides = array<i32>} : memref<1x256xi32, #tpu.memory_space<vmem>>, vector<1x256xi32>,
    return
  }
  func.func @transform_0(%arg0: i32) -> (i32, i32) {
    %c0_i32 = arith.constant 0 : i32
    %c0_i32_0 = arith.constant 0 : i32
    %c0_i32_1 = arith.constant 0 : i32
    return %c0_i32, %c0_i32_0 : i32, i32
  }
  func.func @transform_1(%arg0: i32) -> (i32, i32) {
    %c0_i32 = arith.constant 0 : i32
    %c0_i32_0 = arith.constant 0 : i32
    return %c0_i32, %arg0 : i32, i32
  }
  func.func @transform_2(%arg0: i32) -> (i32, i32) {
    %c0_i32 = arith.constant 0 : i32
    %c0_i32_0 = arith.constant 0 : i32
    return %c0_i32, %arg0 : i32, i32
  }
}

</mosaic_0001>

<llo_original>
// kernel: _lambda_.2
$region0: #{_lambda_.2}
  #allocation0 [shape = 'u32[]', space=smem, size = 0x4, offset = 0x4, fixed_abs, tag = 'smem constant byte address 0x4 - core index']
  #allocation1 [shape = 'u32[72,128]{1,0:T(1,128)}', space=vmem, size = 0x9000, scoped, tag = 'internal scratch']
  #allocation2 [shape = 'u32[2048]{0}', space=vmem, size = 0x2000, scoped, tag = 'scoped memory for _lambda_.2']
  #allocation3 [shape = 'u32[2048]{0}', space=vmem, size = 0x2000, scoped, tag = 'scoped memory for _lambda_.2']
  #allocation4 [shape = 'u32[2048]{0}', space=vmem, size = 0x2000, scoped, tag = 'scoped memory for _lambda_.2']
  #allocation5 [shape = 'u32[2048]{0}', space=vmem, size = 0x2000, scoped, tag = 'scoped memory for _lambda_.2']
  #allocation6 [shape = 'u32[2048]{0}', space=vmem, size = 0x2000, scoped, tag = 'scoped memory for _lambda_.2']
  %s0 = inlined_call_operand.vmem [shape: f32[8,4], index: 0, kind: input, shape index: {}]
  %s1 = inlined_call_operand.vmem [shape: f32[4,200], index: 1, kind: input, shape index: {}]
  %s2 = inlined_call_operand.<no memory space> [shape: f32[], index: 2, kind: input, shape index: {}]
  %s3 = inlined_call_operand.hbm [shape: s32[1,256], index: 3, kind: output, shape index: {}]
  %s4 = sld [smem:[#allocation0]]
  $region18: #{_lambda_.2} parent=0
    _
  %s6 = ssub.s32 1, %s4
  %s7 = scalar_select 0, %s6, %s4
  %v8 = vstv %s2
  $region1: #{_lambda_.2} parent=0
    #allocation7 [shape = 'u8[1024]{0}', space=vmem, size = 0x400, scoped, tag = 'output window, operand 0, single buffered']
    #allocation8 [shape = 's32[1]{0}', space=sflag, size = 0x4, scoped, tag = 'scoped memory for _lambda_.2']
    #allocation9 [shape = 'u8[4096]{0}', space=vmem, size = 0x1000, dematerialized = true, scoped, tag = 'FusionAdapter Buffer %fusion.1 = f32[4,256]{1,0:T(4,128)} fusion(%param_1.1, %param_2), kind=kLoop, calls=%fused_computation.1.clone, metadata={op_name="jit(<lambda>)/jit(_pad)/pad" stack_frame_id=10}']
    %9 = vsyncpa [#allocation8], 0
    // Predicated region
    $region2: #{_lambda_.2} parent=1 // pred_check
      _
    $region3: #{_lambda_.2} parent=1 // pred_check_branch
      %11 = sbr.rel (0) target = $region5
    $region4: #{_lambda_.2} parent=1 // pred_region
      _
    $region5: #{_lambda_.2} parent=1 // pred_fallthru
      _
    // Predicated region
    $region6: #{_lambda_.2} parent=1 // pred_check
      _
    $region7: #{_lambda_.2} parent=1 // pred_check_branch
      %13 = sbr.rel (0) target = $region9
    $region8: #{_lambda_.2} parent=1 // pred_region
      _
    $region9: #{_lambda_.2} parent=1 // pred_fallthru
      _
    %v14 = vld [vmem:[%s1] sm:$0xf]
    %v15 = vlaneseq
    %v16 = vshrl.u32 %v15, 7
    %vm18 = vcmp.lt.s32.totalorder %v16, 4
    %v19 = vsel %vm18, %v14, %v8
    %v20 = vlaneseq
    %v21 = vand.u32 %v20, 127
    %vm23 = vcmp.lt.s32.totalorder %v21, 200
    %v24 = vsel %vm23, %v19, %v8
    %s26 = ssub.s32 16, 1
    %27 = vst [vmem:[#allocation9] sm:%s26] %v24
    %s28 = scalar_lea.vmem %s1, 4
    %v29 = vld [vmem:[%s28] sm:$0xf]
    %v30 = vlaneseq
    %v31 = vshrl.u32 %v30, 7
    %vm33 = vcmp.lt.s32.totalorder %v31, 4
    %v34 = vsel %vm33, %v29, %v8
    %v35 = vlaneseq
    %v36 = vand.u32 %v35, 127
    %v37 = vadd.s32 %v36, 128
    %vm38 = vcmp.lt.s32.totalorder %v37, 200
    %v39 = vsel %vm38, %v34, %v8
    %s40 = scalar_lea.vmem [#allocation9], 4
    %s42 = ssub.s32 16, 1
    %43 = vst [vmem:[%s40] sm:%s42] %v39
    %v44 = vld [vmem:[#allocation9] ss:$4 sm:$0x3]
    %s45 = scalar_lea.vmem [#allocation9], 1
    %v46 = vld [vmem:[%s45] ss:$4 sm:$0x3]
    %s47 = scalar_lea.vmem [#allocation9], 2
    %v48 = vld [vmem:[%s47] ss:$4 sm:$0x3]
    %s49 = scalar_lea.vmem [#allocation9], 3
    %v50 = vld [vmem:[%s49] ss:$4 sm:$0x3]
    %v51 = vld [vmem:[%s0] sm:$0xff]
    %53 = vrot.lane.b32.xlu0 %v51, 2
    %v54 = vpop.permute.xlu0 %53
    %v56 = vsub.f32 %v51, %v54
    %v57 = vmul.f32 %v56, %v56
    %59 = vrot.lane.b32.xlu0 %v57, 127
    %v60 = vpop.permute.xlu0 %59
    %v62 = vadd.f32 %v57, %v60
    %63 = vrot.lane.b32.xlu0 %v51, 1
    %v64 = vpop.permute.xlu0 %63
    %v66 = vmul.f32 %v56, %v64
    %67 = vrot.lane.b32.xlu0 %v51, 3
    %v68 = vpop.permute.xlu0 %67
    %v70 = vmul.f32 %v56, %v68
    %72 = vrot.lane.b32.xlu0 %v70, 127
    %v73 = vpop.permute.xlu0 %72
    %v75 = vsub.f32 %v66, %v73
    %v76 = vmul.f32 %v62, 25.0
    %v77 = vmul.f32 %v62, 0.9698463
    %v78 = vsub.f32 %v48, %v44
    %v79 = vsub.f32 %v50, %v46
    %v80 = vmul.f32 %v78, %v78
    %v81 = vmul.f32 %v79, %v79
    %v82 = vadd.f32 %v80, %v81
    %84 = vset.pattern.permute.xlu0 2
    %85 = vperm.xlu0 %84, %v56
    %v86 = vpop.permute.xlu0 %85
    %v89 = vperm.slane %v46, 0
    %v90 = vperm.slane %v46, 1
    %v93 = vmul.f32 %v86, %v89
    %v94 = vmul.f32 %v86, %v90
    %95 = vset.pattern.permute.xlu0 3
    %96 = vperm.xlu0 %95, %v56
    %v97 = vpop.permute.xlu0 %96
    %v100 = vperm.slane %v44, 0
    %v101 = vperm.slane %v44, 1
    %v104 = vmul.f32 %v97, %v100
    %v105 = vmul.f32 %v97, %v101
    %v106 = vsub.f32 %v93, %v104
    %v107 = vsub.f32 %v94, %v105
    %109 = vset.pattern.permute.xlu0 2
    %110 = vperm.xlu0 %109, %v75
    %v111 = vpop.permute.xlu0 %110
    %v113 = vsub.f32 %v106, %v111
    %v114 = vsub.f32 %v107, %v111
    %v116 = vperm.slane %v50, 0
    %v117 = vperm.slane %v50, 1
    %v120 = vmul.f32 %v86, %v116
    %v121 = vmul.f32 %v86, %v117
    %v123 = vperm.slane %v48, 0
    %v124 = vperm.slane %v48, 1
    %v127 = vmul.f32 %v97, %v123
    %v128 = vmul.f32 %v97, %v124
    %v129 = vsub.f32 %v120, %v127
    %v130 = vsub.f32 %v121, %v128
    %v131 = vsub.f32 %v129, %v111
    %v132 = vsub.f32 %v130, %v111
    %v133 = vmul.f32 %v113, %v113
    %v134 = vmul.f32 %v114, %v114
    %136 = vset.pattern.permute.xlu0 2
    %137 = vperm.xlu0 %136, %v76
    %v138 = vpop.permute.xlu0 %137
    %vm140 = vcmp.lt.f32.partialorder %v133, %v138
    %vm141 = vcmp.lt.f32.partialorder %v134, %v138
    %v142 = vmul.f32 %v131, %v131
    %v143 = vmul.f32 %v132, %v132
    %vm144 = vcmp.lt.f32.partialorder %v142, %v138
    %vm145 = vcmp.lt.f32.partialorder %v143, %v138
    %v147 = vperm.slane %v78, 0
    %v148 = vperm.slane %v78, 1
    %v151 = vmul.f32 %v147, %v86
    %v152 = vmul.f32 %v148, %v86
    %v154 = vperm.slane %v79, 0
    %v155 = vperm.slane %v79, 1
    %v158 = vmul.f32 %v154, %v97
    %v159 = vmul.f32 %v155, %v97
    %v160 = vadd.f32 %v151, %v158
    %v161 = vadd.f32 %v152, %v159
    %v162 = vmul.f32 %v160, %v160
    %v163 = vmul.f32 %v161, %v161
    %v165 = vperm.slane %v82, 0
    %v166 = vperm.slane %v82, 1
    %170 = vset.pattern.permute.xlu0 2
    %171 = vperm.xlu0 %170, %v77
    %v172 = vpop.permute.xlu0 %171
    %v174 = vmul.f32 %v165, %v172
    %v175 = vmul.f32 %v166, %v172
    %vm176 = vcmp.gt.f32.partialorder %v162, %v174
    %vm177 = vcmp.gt.f32.partialorder %v163, %v175
    %vm178 = vmand %vm140, %vm144
    %vm179 = vmand %vm141, %vm145
    %vm180 = vmand %vm178, %vm176
    %vm181 = vmand %vm179, %vm177
    %v182 = vsel %vm180, 1, 0
    %v183 = vsel %vm181, 1, 0
    %v184 = vrot.slane %v182, 4
    %vm185 = vcmp.gt.s32.totalorder %v182, %v184
    %v186 = vsel %vm185, %v182, %v184
    %v187 = vrot.slane %v186, 2
    %vm188 = vcmp.gt.s32.totalorder %v186, %v187
    %v189 = vsel %vm188, %v186, %v187
    %v190 = vrot.slane %v189, 1
    %vm191 = vcmp.gt.s32.totalorder %v189, %v190
    %v192 = vsel %vm191, %v189, %v190
    %v193 = vrot.slane %v183, 4
    %vm194 = vcmp.gt.s32.totalorder %v183, %v193
    %v195 = vsel %vm194, %v183, %v193
    %v196 = vrot.slane %v195, 2
    %vm197 = vcmp.gt.s32.totalorder %v195, %v196
    %v198 = vsel %vm197, %v195, %v196
    %v199 = vrot.slane %v198, 1
    %vm200 = vcmp.gt.s32.totalorder %v198, %v199
    %v201 = vsel %vm200, %v198, %v199
    %v202 = vrot.slane %v201, 7
    %vm203 = vcmask 1040384
    %v204 = vsel %vm203, %v192, %v202
    %v205 = vlaneseq
    %vm206 = vcmp.ge.s32.totalorder %v205, 0
    %vm207 = vcmp.lt.s32.totalorder %v205, 256
    %vm208 = vmand %vm206, %vm207
    %209 = vst.msk [vmem:[#allocation7] sm:$0x3] %vm208, %v204
    // Predicated region
    $region10: #{_lambda_.2} parent=1 // pred_check
      _
    $region11: #{_lambda_.2} parent=1 // pred_check_branch
      %211 = sbr.rel (0) target = $region13
    $region12: #{_lambda_.2} parent=1 // pred_region
      %213 = vsyncadd [#allocation8], 0
      %s215 = sshll.u32 [#allocation7], 4
      %s216 = int_to_ptr.vmem [resolvable:$true] %s215
      %s217 = sshll.u32 %s3, 4
      %s218 = int_to_ptr.hbm [resolvable:$true] %s217
      %220 = dma.vmem_to_hbm [thread:$0]  %s216, 32, %s218, [#allocation8]
    $region13: #{_lambda_.2} parent=1 // pred_fallthru
      _
    // Predicated region
    $region14: #{_lambda_.2} parent=1 // pred_check
      _
    $region15: #{_lambda_.2} parent=1 // pred_check_branch
      %222 = sbr.rel (0) target = $region17
    $region16: #{_lambda_.2} parent=1 // pred_region
      %224 = dma.done [#allocation8], 32
    $region17: #{_lambda_.2} parent=1 // pred_fallthru
      _
    %225 = vsyncpa [#allocation8], 1

</llo_original>
